<compile_context>
chip_gen: v7x
topology: tpu7x:2x2x1
jax: 0.10.0
libtpu: 0.0.40
codegen_flags: <defaults>
</compile_context>

<pallas_src>
import functools

import jax
import jax.numpy as jnp
from jax import lax
from jax.experimental import pallas as pl
from jax.experimental.pallas import tpu as pltpu

NEG_SLOPE = 0.1   # LeakyReLU negative slope
BN_EPS = 1e-5     # PyTorch BatchNorm2d default eps


def _ceil8(n):
    return -(-n // 8) * 8


def _tap_sel(d, stride):
    """Static tap selector along one spatial axis, offset d in {-1, 0, +1}.

    Returns (phase_parity, shift_in_output_units, need_low_mask, need_high_mask).
    Stride-2 inputs are phase-decomposed (space-to-batch) by the wrapper, so every
    tap is a pure lane shift of one parity plane of the *output-sized* grid.
    """
    if stride == 1:
        return 0, d, d < 0, d > 0
    if d == 0:                      # stride 2 (spatial dims padded to even)
        return 0, 0, False, False
    if d == 1:
        return 1, 0, False, False
    return 1, -1, True, False       # d == -1


# ------------------------------ Pallas kernel --------------------------------

def _basic_block_kernel(coord_ref, ph_ref, xs_ref, w1_ref, w2_ref, ws_ref, aff_ref,
                        out_ref, *, stride, ho, wo, cin_p, conv_short):
    mt = out_ref.shape[1]           # lane extent: images-per-step * ho * wo

    def lrelu(v):
        return jnp.where(v > 0, v, NEG_SLOPE * v)

    def shift_lanes(a, s):
        # out[:, l] = a[:, l + s]; lanes that wrap are zeroed by the tap masks.
        if s == 0:
            return a
        return pltpu.roll(a, shift=(-s) % mt, axis=1)

    # Per-lane output coordinates (oh, ow) within each image (precomputed in wrapper).
    oh = coord_ref[0:1, :]
    ow = coord_ref[1:2, :]
    oh_lo, oh_hi = oh >= 1, oh <= ho - 2
    ow_lo, ow_hi = ow >= 1, ow <= wo - 2

    def tap_mask(rlo, rhi, clo, chi):
        m = None
        for need, mm in ((rlo, oh_lo), (rhi, oh_hi), (clo, ow_lo), (chi, ow_hi)):
            if need:
                m = mm if m is None else (m & mm)
        return m

    # ---- conv1: 9 roll+mask taps -> one (Cout, 9*Cin) x (9*Cin, M) MXU dot ------
    n_ph = stride * stride
    phase = [ph_ref[p * cin_p:(p + 1) * cin_p, :] for p in range(n_ph)]
    taps = []
    for dh in (-1, 0, 1):
        pr, jr, rlo, rhi = _tap_sel(dh, stride)
        for dw in (-1, 0, 1):
            pc, jc, clo, chi = _tap_sel(dw, stride)
            blk = shift_lanes(phase[pr * stride + pc], jr * wo + jc)
            m = tap_mask(rlo, rhi, clo, chi)
            taps.append(blk if m is None else jnp.where(m, blk, 0.0))
    p1 = jnp.concatenate(taps, axis=0).astype(jnp.bfloat16)
    acc1 = jnp.dot(w1_ref[...], p1, preferred_element_type=jnp.float32)

    # conv1 bias is folded into the bn2 affine (aff[:, 1]) by the wrapper.
    s2, t2 = aff_ref[:, 0:1], aff_ref[:, 1:2]
    b2, bs = aff_ref[:, 2:3], aff_ref[:, 3:4]
    mid = lrelu(acc1 * s2 + t2)                                  # (cout_p, mt) f32

    # ---- conv2 (stride 1): roll+mask taps of mid -> one fused MXU dot ----------
    taps2 = []
    for dh in (-1, 0, 1):
        for dw in (-1, 0, 1):
            blk = shift_lanes(mid, dh * wo + dw)
            m = tap_mask(dh < 0, dh > 0, dw < 0, dw > 0)
            taps2.append(blk if m is None else jnp.where(m, blk, 0.0))
    p2 = jnp.concatenate(taps2, axis=0).astype(jnp.bfloat16)
    out = jnp.dot(w2_ref[...], p2, preferred_element_type=jnp.float32) + b2

    # ---- shortcut: identity (equalInOut) or strided 1x1 conv -------------------
    if conv_short:
        out = out + jnp.dot(ws_ref[...], xs_ref[...].astype(jnp.bfloat16),
                            preferred_element_type=jnp.float32) + bs
    else:
        out = out + xs_ref[...]
    out_ref[...] = out


# ------------------------------- JAX wrapper ----------------------------------

def _fold_bn(bn):
    gamma, beta, mean, var = bn
    scale = gamma / jnp.sqrt(var + BN_EPS)
    shift = beta - mean * scale
    return scale, shift


def basic_block_forward(x_nchw, p, stride, activate_before_residual):
    """BasicBlock.forward (eval-mode BN, dropout_rate=0) as one fused Pallas kernel."""
    x = x_nchw.astype(jnp.float32)
    n, cin, h, w = x.shape
    cout = p["w1"].shape[0]
    assert p["w1"].shape[1] == cin and stride in (1, 2)
    equal = cin == cout
    if equal:
        assert stride == 1, "equalInOut requires stride == 1"
    abr = activate_before_residual
    act_conv1 = equal or abr            # conv1 consumes lrelu(bn1(x)) on these paths
    act_short = (not equal) and abr     # shortcut consumes the activated x only here
    conv_short = not equal

    ho = (h - 1) // stride + 1
    wo = (w - 1) // stride + 1
    hw = ho * wo
    m_total = n * hw
    cin_p = _ceil8(cin)
    cout_p = _ceil8(cout)

    scale1, shift1 = _fold_bn(p["bn1"])
    scale2, shift2 = _fold_bn(p["bn2"])
    shift2 = shift2 + scale2 * p["b1"]          # fold conv1 bias into the bn2 affine

    # Channel-major (C, N, H, W): batch*spatial will be the dense lane axis.
    xc = jnp.transpose(x, (1, 0, 2, 3))
    if act_conv1 or act_short:
        a = xc * scale1[:, None, None, None] + shift1[:, None, None, None]
        act = jnp.where(a > 0, a, NEG_SLOPE * a)
    else:
        act = None                              # dead lrelu(bn1(x)) branch skipped

    # conv1 input: pad channels to a sublane multiple and (for stride 2) phase-split
    # so every in-kernel tap is a pure lane shift of an output-sized plane.
    conv1_in = act if act_conv1 else xc
    conv1_in = jnp.pad(conv1_in, ((0, cin_p - cin), (0, 0), (0, 0), (0, 0)))
    if stride == 2 and (h % 2 or w % 2):
        conv1_in = jnp.pad(conv1_in, ((0, 0), (0, 0), (0, h % 2), (0, w % 2)))
    if stride == 1:
        phases = conv1_in.reshape(cin_p, m_total)
    else:
        phases = jnp.concatenate(
            [conv1_in[:, :, pr::2, pc::2].reshape(cin_p, m_total)
             for pr in (0, 1) for pc in (0, 1)], axis=0)

    # Shortcut source: raw x (identity path) or the (maybe activated) strided x
    # that feeds the 1x1 conv.
    short_src = act if act_short else xc
    xs = jnp.pad(short_src, ((0, cin_p - cin), (0, 0), (0, 0), (0, 0)))
    xs = xs[:, :, ::stride, ::stride].reshape(cin_p, m_total)

    # Per-lane (oh, ow) coordinates for the in-kernel boundary masks.
    oh_i = jnp.repeat(jnp.arange(ho, dtype=jnp.int32), wo)
    ow_i = jnp.tile(jnp.arange(wo, dtype=jnp.int32), ho)
    coords = jnp.tile(jnp.stack([oh_i, ow_i]), (1, n))          # (2, m_total)

    # Weight slabs: (cout_p, kh, kw, cin_p) -> (cout_p, 9*cin_p); tap order matches
    # the kernel's (dh, dw) loops; bf16 operands, f32 accumulation.
    def conv_slab(wt, ci, ci_p):
        wt = jnp.pad(wt, ((0, cout_p - cout), (0, ci_p - ci), (0, 0), (0, 0)))
        return jnp.transpose(wt, (0, 2, 3, 1)).reshape(cout_p, 9 * ci_p)

    w1s = conv_slab(p["w1"], cin, cin_p).astype(jnp.bfloat16)
    w2s = conv_slab(p["w2"], cout, cout_p).astype(jnp.bfloat16)
    if conv_short:
        ws = jnp.pad(p["ws"][:, :, 0, 0], ((0, cout_p - cout), (0, cin_p - cin)))
        bs = jnp.pad(p["bs"], (0, cout_p - cout))
    else:
        ws = jnp.zeros((cout_p, cin_p), jnp.float32)
        bs = jnp.zeros((cout_p,), jnp.float32)
    ws = ws.astype(jnp.bfloat16)

    aff = jnp.stack([jnp.pad(scale2, (0, cout_p - cout)),
                     jnp.pad(shift2, (0, cout_p - cout)),
                     jnp.pad(p["b2"], (0, cout_p - cout)),
                     bs], axis=1)                               # (cout_p, 4) f32

    # Batch tile: fold whole images into the lane axis; keep the per-step lane
    # extent a multiple of 128 (dense, unmasked stores) whenever possible.
    bt = n
    if hw % 128 == 0 and hw >= 1024:
        bt = 1
    else:
        for cand in range(min(n, max(1, 1024 // hw)), 0, -1):
            if n % cand == 0 and (cand * hw) % 128 == 0:
                bt = cand
                break
    mt = bt * hw

    kernel = functools.partial(
        _basic_block_kernel, stride=stride, ho=ho, wo=wo, cin_p=cin_p,
        conv_short=conv_short)

    out = pl.pallas_call(
        kernel,
        out_shape=jax.ShapeDtypeStruct((cout_p, m_total), jnp.float32),
        grid=(n // bt,),
        in_specs=[
            pl.BlockSpec((2, mt), lambda i: (0, i)),
            pl.BlockSpec((stride * stride * cin_p, mt), lambda i: (0, i)),
            pl.BlockSpec((cin_p, mt), lambda i: (0, i)),
            pl.BlockSpec((cout_p, 9 * cin_p), lambda i: (0, 0)),
            pl.BlockSpec((cout_p, 9 * cout_p), lambda i: (0, 0)),
            pl.BlockSpec((cout_p, cin_p), lambda i: (0, 0)),
            pl.BlockSpec((cout_p, 4), lambda i: (0, 0)),
        ],
        out_specs=pl.BlockSpec((cout_p, mt), lambda i: (0, i)),
        compiler_params=pltpu.CompilerParams(
            dimension_semantics=("parallel",)),
    )(coords, phases, xs, w1s, w2s, ws, aff)

    out = out[:cout].reshape(cout, n, ho, wo)
    return jnp.transpose(out, (1, 0, 2, 3))                     # -> NCHW


# --------------------- deterministic parameter construction -------------------

def make_params(key, in_planes, out_planes):
    ks = jax.random.split(key, 14)
    p = {
        "w1": jax.random.normal(ks[0], (out_planes, in_planes, 3, 3), jnp.float32)
              * (2.0 / (9 * in_planes)) ** 0.5,
        "b1": jax.random.normal(ks[1], (out_planes,), jnp.float32) * 0.1,
        "w2": jax.random.normal(ks[2], (out_planes, out_planes, 3, 3), jnp.float32)
              * (2.0 / (9 * out_planes)) ** 0.5,
        "b2": jax.random.normal(ks[3], (out_planes,), jnp.float32) * 0.1,
        "bn1": (jax.random.uniform(ks[4], (in_planes,), jnp.float32, 0.5, 1.5),
                jax.random.normal(ks[5], (in_planes,), jnp.float32) * 0.1,
                jax.random.normal(ks[6], (in_planes,), jnp.float32) * 0.1,
                jax.random.uniform(ks[7], (in_planes,), jnp.float32, 0.5, 1.5)),
        "bn2": (jax.random.uniform(ks[8], (out_planes,), jnp.float32, 0.5, 1.5),
                jax.random.normal(ks[9], (out_planes,), jnp.float32) * 0.1,
                jax.random.normal(ks[10], (out_planes,), jnp.float32) * 0.1,
                jax.random.uniform(ks[11], (out_planes,), jnp.float32, 0.5, 1.5)),
        "ws": None,
        "bs": None,
    }
    if in_planes != out_planes:
        p["ws"] = jax.random.normal(ks[12], (out_planes, in_planes, 1, 1),
                                    jnp.float32) * (2.0 / in_planes) ** 0.5
        p["bs"] = jax.random.normal(ks[13], (out_planes,), jnp.float32) * 0.1
    return p


# ----------------------------- pure-JAX reference -----------------------------

def _ref_bn_lrelu(x, bn):
    scale, shift = _fold_bn(bn)
    y = x * scale[None, :, None, None] + shift[None, :, None, None]
    return jnp.where(y > 0, y, NEG_SLOPE * y)


def _ref_conv(x, w, b, stride, pad, dot_dtype):
    y = lax.conv_general_dilated(
        x.astype(dot_dtype), w.astype(dot_dtype), (stride, stride),
        [(pad, pad), (pad, pad)], dimension_numbers=("NCHW", "OIHW", "NCHW"),
        preferred_element_type=jnp.float32)
    return y + b[None, :, None, None]


def _ref_basic_block(x, p, stride, equal, abr, dot_dtype=jnp.float32):
    if (not equal) and abr:
        x = _ref_bn_lrelu(x, p["bn1"])
        out = x
    else:
        out = _ref_bn_lrelu(x, p["bn1"])
    out = _ref_conv(out if equal else x, p["w1"], p["b1"], stride, 1, dot_dtype)
    out = _ref_bn_lrelu(out, p["bn2"])
    out = _ref_conv(out, p["w2"], p["b2"], 1, 1, dot_dtype)
    short = x if equal else _ref_conv(x, p["ws"], p["bs"], stride, 0, dot_dtype)
    return short + out


# ------------------------------------ main ------------------------------------

if __name__ == "__main__":
    key = jax.random.PRNGKey(0)
    # (in_planes, out_planes, stride, activate_before_residual, H, W)
    configs = [
        (4, 8, 2, True, 16, 16),    # not equalInOut, stride 2, activate-before-residual
        (8, 8, 1, False, 8, 8),     # equalInOut (identity shortcut)
        (4, 8, 1, False, 16, 16),   # not equalInOut, abr=False (raw-x conv1 path)
    ]
    for idx, (cin, cout, stride, abr, hh, ww) in enumerate(configs):
        key, kx, kp = jax.random.split(key, 3)
        x = jax.random.normal(kx, (2, cin, hh, ww), jnp.float32)     # NCHW
        p = make_params(kp, cin, cout)

        fwd = jax.jit(functools.partial(basic_block_forward, stride=stride,
                                        activate_before_residual=abr))
        out = fwd(x, p)
        jax.block_until_ready(out)

        equal = cin == cout
        # Matched-precision reference (bf16 conv operands, f32 accumulation) and a
        # loose full-f32 sanity bound on the bf16 rounding.
        ref16 = _ref_basic_block(x, p, stride, equal, abr, jnp.bfloat16)
        ref32 = _ref_basic_block(x, p, stride, equal, abr, jnp.float32)
        assert out.shape == ref32.shape, (idx, out.shape, ref32.shape)
        e16 = float(jnp.max(jnp.abs(out - ref16)))
        e32 = float(jnp.max(jnp.abs(out - ref32)))
        assert jnp.allclose(out, ref16, rtol=2e-2, atol=2e-2), (idx, e16)
        assert jnp.allclose(out, ref32, rtol=1e-1, atol=1e-1), (idx, e32)

    print("KERNEL_OK")
</pallas_src>

<mosaic_0001>
module attributes {stable_mosaic.version = 11 : i64} {
  func.func @_basic_block_kernel(%arg0: i32, %arg1: memref<2x128xi32, #tpu.memory_space<vmem>>, %arg2: memref<32x128xf32, #tpu.memory_space<vmem>>, %arg3: memref<8x128xf32, #tpu.memory_space<vmem>>, %arg4: memref<8x72xbf16, #tpu.memory_space<vmem>>, %arg5: memref<8x72xbf16, #tpu.memory_space<vmem>>, %arg6: memref<8x8xbf16, #tpu.memory_space<vmem>>, %arg7: memref<8x4xf32, #tpu.memory_space<vmem>>, %arg8: memref<8x128xf32, #tpu.memory_space<vmem>>) attributes {dimension_semantics = [#tpu.dimension_semantics<parallel>], iteration_bounds = array<i64: 1>, scalar_prefetch = 0 : i64, scratch_operands = 0 : i64, tpu.core_type = #tpu.core_type<tc>, window_params = [{transform_indices = @transform_0, window_bounds = array<i64: 2, 128>}, {transform_indices = @transform_1, window_bounds = array<i64: 32, 128>}, {transform_indices = @transform_2, window_bounds = array<i64: 8, 128>}, {pipeline_mode = #tpu.pipeline_mode<synchronous>, transform_indices = @transform_3, window_bounds = array<i64: 8, 72>}, {pipeline_mode = #tpu.pipeline_mode<synchronous>, transform_indices = @transform_4, window_bounds = array<i64: 8, 72>}, {pipeline_mode = #tpu.pipeline_mode<synchronous>, transform_indices = @transform_5, window_bounds = array<i64: 8, 8>}, {pipeline_mode = #tpu.pipeline_mode<synchronous>, transform_indices = @transform_6, window_bounds = array<i64: 8, 4>}, {transform_indices = @transform_7, window_bounds = array<i64: 8, 128>}]} {
    %c0 = arith.constant 0 : index
    %c0_0 = arith.constant 0 : index
    %0 = vector.load %arg1[%c0, %c0_0] : memref<2x128xi32, #tpu.memory_space<vmem>>, vector<1x128xi32>
    %c1 = arith.constant 1 : index
    %c0_1 = arith.constant 0 : index
    %1 = vector.load %arg1[%c1, %c0_1] : memref<2x128xi32, #tpu.memory_space<vmem>>, vector<1x128xi32>
    %c1_i32 = arith.constant 1 : i32
    %2 = vector.broadcast %c1_i32 : i32 to vector<1x128xi32>
    %3 = arith.cmpi sge, %0, %2 : vector<1x128xi32>
    %c6_i32 = arith.constant 6 : i32
    %4 = vector.broadcast %c6_i32 : i32 to vector<1x128xi32>
    %5 = arith.cmpi sle, %0, %4 : vector<1x128xi32>
    %c1_i32_2 = arith.constant 1 : i32
    %6 = vector.broadcast %c1_i32_2 : i32 to vector<1x128xi32>
    %7 = arith.cmpi sge, %1, %6 : vector<1x128xi32>
    %c6_i32_3 = arith.constant 6 : i32
    %8 = vector.broadcast %c6_i32_3 : i32 to vector<1x128xi32>
    %9 = arith.cmpi sle, %1, %8 : vector<1x128xi32>
    %c0_4 = arith.constant 0 : index
    %c0_5 = arith.constant 0 : index
    %10 = vector.load %arg2[%c0_4, %c0_5] : memref<32x128xf32, #tpu.memory_space<vmem>>, vector<8x128xf32>
    %c8 = arith.constant 8 : index
    %c0_6 = arith.constant 0 : index
    %11 = vector.load %arg2[%c8, %c0_6] : memref<32x128xf32, #tpu.memory_space<vmem>>, vector<8x128xf32>
    %c16 = arith.constant 16 : index
    %c0_7 = arith.constant 0 : index
    %12 = vector.load %arg2[%c16, %c0_7] : memref<32x128xf32, #tpu.memory_space<vmem>>, vector<8x128xf32>
    %c24 = arith.constant 24 : index
    %c0_8 = arith.constant 0 : index
    %13 = vector.load %arg2[%c24, %c0_8] : memref<32x128xf32, #tpu.memory_space<vmem>>, vector<8x128xf32>
    %c9_i32 = arith.constant 9 : i32
    %14 = tpu.dynamic_rotate %13 by %c9_i32 dim 1 : vector<8x128xf32>, i32 -> vector<8x128xf32>
    %15 = arith.andi %3, %7 : vector<1x128xi1>
    %cst = arith.constant 0.000000e+00 : f32
    %16 = vector.shape_cast %15 : vector<1x128xi1> to vector<1x128xi1>
    %17 = vector.broadcast %16 : vector<1x128xi1> to vector<8x128xi1>
    %18 = vector.broadcast %cst : f32 to vector<8x128xf32>
    %19 = arith.select %17, %14, %18 : vector<8x128xi1>, vector<8x128xf32>
    %c8_i32 = arith.constant 8 : i32
    %20 = tpu.dynamic_rotate %12 by %c8_i32 dim 1 : vector<8x128xf32>, i32 -> vector<8x128xf32>
    %cst_9 = arith.constant 0.000000e+00 : f32
    %21 = vector.shape_cast %3 : vector<1x128xi1> to vector<1x128xi1>
    %22 = vector.broadcast %21 : vector<1x128xi1> to vector<8x128xi1>
    %23 = vector.broadcast %cst_9 : f32 to vector<8x128xf32>
    %24 = arith.select %22, %20, %23 : vector<8x128xi1>, vector<8x128xf32>
    %c8_i32_10 = arith.constant 8 : i32
    %25 = tpu.dynamic_rotate %13 by %c8_i32_10 dim 1 : vector<8x128xf32>, i32 -> vector<8x128xf32>
    %cst_11 = arith.constant 0.000000e+00 : f32
    %26 = vector.shape_cast %3 : vector<1x128xi1> to vector<1x128xi1>
    %27 = vector.broadcast %26 : vector<1x128xi1> to vector<8x128xi1>
    %28 = vector.broadcast %cst_11 : f32 to vector<8x128xf32>
    %29 = arith.select %27, %25, %28 : vector<8x128xi1>, vector<8x128xf32>
    %c1_i32_12 = arith.constant 1 : i32
    %30 = tpu.dynamic_rotate %11 by %c1_i32_12 dim 1 : vector<8x128xf32>, i32 -> vector<8x128xf32>
    %cst_13 = arith.constant 0.000000e+00 : f32
    %31 = vector.shape_cast %7 : vector<1x128xi1> to vector<1x128xi1>
    %32 = vector.broadcast %31 : vector<1x128xi1> to vector<8x128xi1>
    %33 = vector.broadcast %cst_13 : f32 to vector<8x128xf32>
    %34 = arith.select %32, %30, %33 : vector<8x128xi1>, vector<8x128xf32>
    %c1_i32_14 = arith.constant 1 : i32
    %35 = tpu.dynamic_rotate %13 by %c1_i32_14 dim 1 : vector<8x128xf32>, i32 -> vector<8x128xf32>
    %cst_15 = arith.constant 0.000000e+00 : f32
    %36 = vector.shape_cast %7 : vector<1x128xi1> to vector<1x128xi1>
    %37 = vector.broadcast %36 : vector<1x128xi1> to vector<8x128xi1>
    %38 = vector.broadcast %cst_15 : f32 to vector<8x128xf32>
    %39 = arith.select %37, %35, %38 : vector<8x128xi1>, vector<8x128xf32>
    %40 = tpu.concatenate %19, %24, %29, %34, %10, %11, %39, %12, %13 in 0 : vector<8x128xf32>, vector<8x128xf32>, vector<8x128xf32>, vector<8x128xf32>, vector<8x128xf32>, vector<8x128xf32>, vector<8x128xf32>, vector<8x128xf32>, vector<8x128xf32> -> vector<72x128xf32>
    %41 = arith.truncf %40 : vector<72x128xf32> to vector<72x128xbf16>
    %c0_16 = arith.constant 0 : index
    %c0_17 = arith.constant 0 : index
    %42 = vector.load %arg4[%c0_16, %c0_17] : memref<8x72xbf16, #tpu.memory_space<vmem>>, vector<8x72xbf16>
    %cst_18 = arith.constant dense<0.000000e+00> : vector<8x128xf32>
    %43 = tpu.matmul %42, %41, %cst_18 {dimension_numbers = #tpu.dot_dimension_numbers<[1], [0], [0], [1], [0, 0, 1, 1], [], []>} : vector<8x72xbf16>, vector<72x128xbf16>, vector<8x128xf32> -> vector<8x128xf32>
    %c0_19 = arith.constant 0 : index
    %c0_20 = arith.constant 0 : index
    %44 = vector.load %arg7[%c0_19, %c0_20] : memref<8x4xf32, #tpu.memory_space<vmem>>, vector<8x1xf32>
    %c0_21 = arith.constant 0 : index
    %c1_22 = arith.constant 1 : index
    %45 = vector.load %arg7[%c0_21, %c1_22] : memref<8x4xf32, #tpu.memory_space<vmem>>, vector<8x1xf32>
    %c0_23 = arith.constant 0 : index
    %c2 = arith.constant 2 : index
    %46 = vector.load %arg7[%c0_23, %c2] : memref<8x4xf32, #tpu.memory_space<vmem>>, vector<8x1xf32>
    %c0_24 = arith.constant 0 : index
    %c3 = arith.constant 3 : index
    %47 = vector.load %arg7[%c0_24, %c3] : memref<8x4xf32, #tpu.memory_space<vmem>>, vector<8x1xf32>
    %48 = vector.broadcast %44 : vector<8x1xf32> to vector<8x128xf32>
    %49 = arith.mulf %43, %48 : vector<8x128xf32>
    %50 = vector.broadcast %45 : vector<8x1xf32> to vector<8x128xf32>
    %51 = arith.addf %49, %50 : vector<8x128xf32>
    %cst_25 = arith.constant 0.000000e+00 : f32
    %52 = vector.broadcast %cst_25 : f32 to vector<8x128xf32>
    %53 = arith.cmpf ogt, %51, %52 : vector<8x128xf32>
    %cst_26 = arith.constant 1.000000e-01 : f32
    %54 = vector.broadcast %cst_26 : f32 to vector<8x128xf32>
    %55 = arith.mulf %54, %51 : vector<8x128xf32>
    %56 = arith.select %53, %51, %55 : vector<8x128xi1>, vector<8x128xf32>
    %c9_i32_27 = arith.constant 9 : i32
    %57 = tpu.dynamic_rotate %56 by %c9_i32_27 dim 1 : vector<8x128xf32>, i32 -> vector<8x128xf32>
    %58 = arith.andi %3, %7 : vector<1x128xi1>
    %cst_28 = arith.constant 0.000000e+00 : f32
    %59 = vector.shape_cast %58 : vector<1x128xi1> to vector<1x128xi1>
    %60 = vector.broadcast %59 : vector<1x128xi1> to vector<8x128xi1>
    %61 = vector.broadcast %cst_28 : f32 to vector<8x128xf32>
    %62 = arith.select %60, %57, %61 : vector<8x128xi1>, vector<8x128xf32>
    %c8_i32_29 = arith.constant 8 : i32
    %63 = tpu.dynamic_rotate %56 by %c8_i32_29 dim 1 : vector<8x128xf32>, i32 -> vector<8x128xf32>
    %cst_30 = arith.constant 0.000000e+00 : f32
    %64 = vector.shape_cast %3 : vector<1x128xi1> to vector<1x128xi1>
    %65 = vector.broadcast %64 : vector<1x128xi1> to vector<8x128xi1>
    %66 = vector.broadcast %cst_30 : f32 to vector<8x128xf32>
    %67 = arith.select %65, %63, %66 : vector<8x128xi1>, vector<8x128xf32>
    %c7_i32 = arith.constant 7 : i32
    %68 = tpu.dynamic_rotate %56 by %c7_i32 dim 1 : vector<8x128xf32>, i32 -> vector<8x128xf32>
    %69 = arith.andi %3, %9 : vector<1x128xi1>
    %cst_31 = arith.constant 0.000000e+00 : f32
    %70 = vector.shape_cast %69 : vector<1x128xi1> to vector<1x128xi1>
    %71 = vector.broadcast %70 : vector<1x128xi1> to vector<8x128xi1>
    %72 = vector.broadcast %cst_31 : f32 to vector<8x128xf32>
    %73 = arith.select %71, %68, %72 : vector<8x128xi1>, vector<8x128xf32>
    %c1_i32_32 = arith.constant 1 : i32
    %74 = tpu.dynamic_rotate %56 by %c1_i32_32 dim 1 : vector<8x128xf32>, i32 -> vector<8x128xf32>
    %cst_33 = arith.constant 0.000000e+00 : f32
    %75 = vector.shape_cast %7 : vector<1x128xi1> to vector<1x128xi1>
    %76 = vector.broadcast %75 : vector<1x128xi1> to vector<8x128xi1>
    %77 = vector.broadcast %cst_33 : f32 to vector<8x128xf32>
    %78 = arith.select %76, %74, %77 : vector<8x128xi1>, vector<8x128xf32>
    %c127_i32 = arith.constant 127 : i32
    %79 = tpu.dynamic_rotate %56 by %c127_i32 dim 1 : vector<8x128xf32>, i32 -> vector<8x128xf32>
    %cst_34 = arith.constant 0.000000e+00 : f32
    %80 = vector.shape_cast %9 : vector<1x128xi1> to vector<1x128xi1>
    %81 = vector.broadcast %80 : vector<1x128xi1> to vector<8x128xi1>
    %82 = vector.broadcast %cst_34 : f32 to vector<8x128xf32>
    %83 = arith.select %81, %79, %82 : vector<8x128xi1>, vector<8x128xf32>
    %c121_i32 = arith.constant 121 : i32
    %84 = tpu.dynamic_rotate %56 by %c121_i32 dim 1 : vector<8x128xf32>, i32 -> vector<8x128xf32>
    %85 = arith.andi %5, %7 : vector<1x128xi1>
    %cst_35 = arith.constant 0.000000e+00 : f32
    %86 = vector.shape_cast %85 : vector<1x128xi1> to vector<1x128xi1>
    %87 = vector.broadcast %86 : vector<1x128xi1> to vector<8x128xi1>
    %88 = vector.broadcast %cst_35 : f32 to vector<8x128xf32>
    %89 = arith.select %87, %84, %88 : vector<8x128xi1>, vector<8x128xf32>
    %c120_i32 = arith.constant 120 : i32
    %90 = tpu.dynamic_rotate %56 by %c120_i32 dim 1 : vector<8x128xf32>, i32 -> vector<8x128xf32>
    %cst_36 = arith.constant 0.000000e+00 : f32
    %91 = vector.shape_cast %5 : vector<1x128xi1> to vector<1x128xi1>
    %92 = vector.broadcast %91 : vector<1x128xi1> to vector<8x128xi1>
    %93 = vector.broadcast %cst_36 : f32 to vector<8x128xf32>
    %94 = arith.select %92, %90, %93 : vector<8x128xi1>, vector<8x128xf32>
    %c119_i32 = arith.constant 119 : i32
    %95 = tpu.dynamic_rotate %56 by %c119_i32 dim 1 : vector<8x128xf32>, i32 -> vector<8x128xf32>
    %96 = arith.andi %5, %9 : vector<1x128xi1>
    %cst_37 = arith.constant 0.000000e+00 : f32
    %97 = vector.shape_cast %96 : vector<1x128xi1> to vector<1x128xi1>
    %98 = vector.broadcast %97 : vector<1x128xi1> to vector<8x128xi1>
    %99 = vector.broadcast %cst_37 : f32 to vector<8x128xf32>
    %100 = arith.select %98, %95, %99 : vector<8x128xi1>, vector<8x128xf32>
    %101 = tpu.concatenate %62, %67, %73, %78, %56, %83, %89, %94, %100 in 0 : vector<8x128xf32>, vector<8x128xf32>, vector<8x128xf32>, vector<8x128xf32>, vector<8x128xf32>, vector<8x128xf32>, vector<8x128xf32>, vector<8x128xf32>, vector<8x128xf32> -> vector<72x128xf32>
    %102 = arith.truncf %101 : vector<72x128xf32> to vector<72x128xbf16>
    %c0_38 = arith.constant 0 : index
    %c0_39 = arith.constant 0 : index
    %103 = vector.load %arg5[%c0_38, %c0_39] : memref<8x72xbf16, #tpu.memory_space<vmem>>, vector<8x72xbf16>
    %cst_40 = arith.constant dense<0.000000e+00> : vector<8x128xf32>
    %104 = tpu.matmul %103, %102, %cst_40 {dimension_numbers = #tpu.dot_dimension_numbers<[1], [0], [0], [1], [0, 0, 1, 1], [], []>} : vector<8x72xbf16>, vector<72x128xbf16>, vector<8x128xf32> -> vector<8x128xf32>
    %105 = vector.broadcast %46 : vector<8x1xf32> to vector<8x128xf32>
    %106 = arith.addf %104, %105 : vector<8x128xf32>
    %c0_41 = arith.constant 0 : index
    %c0_42 = arith.constant 0 : index
    %107 = vector.load %arg6[%c0_41, %c0_42] : memref<8x8xbf16, #tpu.memory_space<vmem>>, vector<8x8xbf16>
    %c0_43 = arith.constant 0 : index
    %c0_44 = arith.constant 0 : index
    %108 = vector.load %arg3[%c0_43, %c0_44] : memref<8x128xf32, #tpu.memory_space<vmem>>, vector<8x128xf32>
    %109 = arith.truncf %108 : vector<8x128xf32> to vector<8x128xbf16>
    %cst_45 = arith.constant dense<0.000000e+00> : vector<8x128xf32>
    %110 = tpu.matmul %107, %109, %cst_45 {dimension_numbers = #tpu.dot_dimension_numbers<[1], [0], [0], [1], [0, 0, 1, 1], [], []>} : vector<8x8xbf16>, vector<8x128xbf16>, vector<8x128xf32> -> vector<8x128xf32>
    %111 = arith.addf %106, %110 : vector<8x128xf32>
    %112 = vector.broadcast %47 : vector<8x1xf32> to vector<8x128xf32>
    %113 = arith.addf %111, %112 : vector<8x128xf32>
    %c0_46 = arith.constant 0 : index
    %c0_47 = arith.constant 0 : index
    %114 = vector.load %arg8[%c0_46, %c0_47] : memref<8x128xf32, #tpu.memory_space<vmem>>, vector<8x128xf32>
    tpu.vector_store %arg8[%c0_46, %c0_47], %113 {strides = array<i32>} : memref<8x128xf32, #tpu.memory_space<vmem>>, vector<8x128xf32>,
    return
  }
  func.func @transform_0(%arg0: i32) -> (i32, i32) {
    %c0_i32 = arith.constant 0 : i32
    %c0_i32_0 = arith.constant 0 : i32
    return %c0_i32, %arg0 : i32, i32
  }
  func.func @transform_1(%arg0: i32) -> (i32, i32) {
    %c0_i32 = arith.constant 0 : i32
    %c0_i32_0 = arith.constant 0 : i32
    return %c0_i32, %arg0 : i32, i32
  }
  func.func @transform_2(%arg0: i32) -> (i32, i32) {
    %c0_i32 = arith.constant 0 : i32
    %c0_i32_0 = arith.constant 0 : i32
    return %c0_i32, %arg0 : i32, i32
  }
  func.func @transform_3(%arg0: i32) -> (i32, i32) {
    %c0_i32 = arith.constant 0 : i32
    %c0_i32_0 = arith.constant 0 : i32
    %c0_i32_1 = arith.constant 0 : i32
    return %c0_i32, %c0_i32_0 : i32, i32
  }
  func.func @transform_4(%arg0: i32) -> (i32, i32) {
    %c0_i32 = arith.constant 0 : i32
    %c0_i32_0 = arith.constant 0 : i32
    %c0_i32_1 = arith.constant 0 : i32
    return %c0_i32, %c0_i32_0 : i32, i32
  }
  func.func @transform_5(%arg0: i32) -> (i32, i32) {
    %c0_i32 = arith.constant 0 : i32
    %c0_i32_0 = arith.constant 0 : i32
    %c0_i32_1 = arith.constant 0 : i32
    return %c0_i32, %c0_i32_0 : i32, i32
  }
  func.func @transform_6(%arg0: i32) -> (i32, i32) {
    %c0_i32 = arith.constant 0 : i32
    %c0_i32_0 = arith.constant 0 : i32
    %c0_i32_1 = arith.constant 0 : i32
    return %c0_i32, %c0_i32_0 : i32, i32
  }
  func.func @transform_7(%arg0: i32) -> (i32, i32) {
    %c0_i32 = arith.constant 0 : i32
    %c0_i32_0 = arith.constant 0 : i32
    return %c0_i32, %arg0 : i32, i32
  }
}

</mosaic_0001>

<llo_original>
// kernel: tile.19
$region0: #{tile.19}
  %s0 = inlined_call_operand.vmem [shape: s32[2,2,64], index: 0, kind: input, shape index: {}]
  %s1 = inlined_call_operand.vmem [shape: s32[2,128], index: 1, kind: output, shape index: {}]
  $region1: #{tile.19} parent=0
    #allocation0 [shape = 'u8[4096]{0}', space=vmem, size = 0x1000, scoped, tag = 'scoped mem for output reshape']
    #allocation1 [shape = 'u8[8192]{0}', space=vmem, size = 0x2000, scoped, tag = 'scoped mem for input reshape']
    %s3 = sshllo.u32 0, 2
    %s4 = scalar_lea.vmem %s0, 2
    %v5 = vld [vmem:[%s4] sm:%s3]
    %s6 = scalar_lea.vmem [#allocation1], 8
    %7 = vst [vmem:[%s6] sm:%s3] %v5
    %v8 = vld [vmem:[%s0] sm:%s3]
    %9 = vst [vmem:[#allocation1] sm:%s3] %v8
    %s10 = smov 3
    %v11 = vld [vmem:[#allocation1] ss:$8 sm:%s10]
    %vm12 = vcmask 523264
    %13 = vst.msk [vmem:[#allocation0] sm:$0x3] %vm12, %v11
    %s14 = scalar_lea.vmem [#allocation1], 1
    %s15 = smov 3
    %v16 = vld [vmem:[%s14] ss:$8 sm:%s15]
    %17 = vrot.lane.b32.xlu0 %v16, 64
    %v18 = vpop.permute.xlu0 %17
    %vm19 = vcmask 1048064
    %20 = vst.msk [vmem:[#allocation0] sm:$0x3] %vm19, %v18
    %s22 = sshllo.u32 0, 2
    %v24 = vld [vmem:[#allocation0] sm:%s22]
    %s25 = sshllo.u32 0, 2
    %26 = vst [vmem:[%s1] sm:%s25] %v24

// kernel: basic_block_forward.1
$region0: #{basic_block_forward.1}
  #allocation0 [shape = 'u32[]', space=smem, size = 0x4, offset = 0x4, fixed_abs, tag = 'smem constant byte address 0x4 - core index']
  #allocation1 [shape = 'u32[144,128]{1,0:T(1,128)}', space=vmem, size = 0x12000, scoped, tag = 'internal scratch']
  %s0 = inlined_call_operand.vmem [shape: s32[2,128], index: 0, kind: input, shape index: {}]
  %s1 = inlined_call_operand.vmem [shape: f32[32,128], index: 1, kind: input, shape index: {}]
  %s2 = inlined_call_operand.vmem [shape: f32[8,128], index: 2, kind: input, shape index: {}]
  %s3 = inlined_call_operand.vmem [shape: bf16[8,72], index: 3, kind: input, shape index: {}]
  %s4 = inlined_call_operand.vmem [shape: bf16[8,72], index: 4, kind: input, shape index: {}]
  %s5 = inlined_call_operand.vmem [shape: bf16[8,8], index: 5, kind: input, shape index: {}]
  %s6 = inlined_call_operand.vmem [shape: f32[8,4], index: 6, kind: input, shape index: {}]
  %s7 = inlined_call_operand.vmem [shape: f32[8,128], index: 7, kind: output, shape index: {}]
  %s8 = sld [smem:[#allocation0]]
  $region38: #{basic_block_forward.1} parent=0
    _
  %s10 = ssub.s32 1, %s8
  %s11 = scalar_select 0, %s10, %s8
  // Predicated region
  $region2: #{basic_block_forward.1} parent=0 // pred_check
    _
  $region3: #{basic_block_forward.1} parent=0 // pred_check_branch
    %13 = sbr.rel (0) target = $region5
  $region4: #{basic_block_forward.1} parent=0 // pred_region
    _
  $region5: #{basic_block_forward.1} parent=0 // pred_fallthru
    _
  // Predicated region
  $region6: #{basic_block_forward.1} parent=0 // pred_check
    _
  $region7: #{basic_block_forward.1} parent=0 // pred_check_branch
    %15 = sbr.rel (0) target = $region9
  $region8: #{basic_block_forward.1} parent=0 // pred_region
    _
  $region9: #{basic_block_forward.1} parent=0 // pred_fallthru
    _
  // Predicated region
  $region10: #{basic_block_forward.1} parent=0 // pred_check
    _
  $region11: #{basic_block_forward.1} parent=0 // pred_check_branch
    %17 = sbr.rel (0) target = $region13
  $region12: #{basic_block_forward.1} parent=0 // pred_region
    _
  $region13: #{basic_block_forward.1} parent=0 // pred_fallthru
    _
  // Predicated region
  $region14: #{basic_block_forward.1} parent=0 // pred_check
    _
  $region15: #{basic_block_forward.1} parent=0 // pred_check_branch
    %19 = sbr.rel (0) target = $region17
  $region16: #{basic_block_forward.1} parent=0 // pred_region
    _
  $region17: #{basic_block_forward.1} parent=0 // pred_fallthru
    _
  // Predicated region
  $region18: #{basic_block_forward.1} parent=0 // pred_check
    _
  $region19: #{basic_block_forward.1} parent=0 // pred_check_branch
    %21 = sbr.rel (0) target = $region21
  $region20: #{basic_block_forward.1} parent=0 // pred_region
    _
  $region21: #{basic_block_forward.1} parent=0 // pred_fallthru
    _
  // Predicated region
  $region22: #{basic_block_forward.1} parent=0 // pred_check
    _
  $region23: #{basic_block_forward.1} parent=0 // pred_check_branch
    %23 = sbr.rel (0) target = $region25
  $region24: #{basic_block_forward.1} parent=0 // pred_region
    _
  $region25: #{basic_block_forward.1} parent=0 // pred_fallthru
    _
  // Predicated region
  $region26: #{basic_block_forward.1} parent=0 // pred_check
    _
  $region27: #{basic_block_forward.1} parent=0 // pred_check_branch
    %25 = sbr.rel (0) target = $region29
  $region28: #{basic_block_forward.1} parent=0 // pred_region
    _
  $region29: #{basic_block_forward.1} parent=0 // pred_fallthru
    _
  %v27 = vld [vmem:[%s0] sm:$0x1]
  %v28 = vld [vmem:[%s0 + $0x1] sm:$0x1]
  %vm29 = vcmp.ge.s32.totalorder %v27, 1
  %vm30 = vcmp.le.s32.totalorder %v27, 6
  %vm31 = vcmp.ge.s32.totalorder %v28, 1
  %vm32 = vcmp.le.s32.totalorder %v28, 6
  %v33 = vld [vmem:[%s1] sm:$0xff]
  %v34 = vld [vmem:[%s1 + $0x8] sm:$0xff]
  %v35 = vld [vmem:[%s1 + $0x10] sm:$0xff]
  %v36 = vld [vmem:[%s1 + $0x18] sm:$0xff]
  %37 = vrot.lane.b32.xlu0 %v36, 9
  %v38 = vpop.permute.xlu0 %37
  %vm39 = vmand %vm29, %vm31
  %v40 = vsel %vm39, 1, 0
  %v41 = vlaneseq
  %v42 = vshrl.u32 %v41, 7
  %v43 = vsub.s32 0, %v42
  %v44 = vrot.slane %v40, %v43
  %vm45 = vcmp.eq.s32.totalorder %v44, 1
  %v46 = vsel %vm45, %v38, 0.0
  %47 = vrot.lane.b32.xlu0 %v35, 8
  %v48 = vpop.permute.xlu0 %47
  %v49 = vsel %vm29, 1, 0
  %v50 = vlaneseq
  %v51 = vshrl.u32 %v50, 7
  %v52 = vsub.s32 0, %v51
  %v53 = vrot.slane %v49, %v52
  %vm54 = vcmp.eq.s32.totalorder %v53, 1
  %v55 = vsel %vm54, %v48, 0.0
  %56 = vrot.lane.b32.xlu0 %v36, 8
  %v57 = vpop.permute.xlu0 %56
  %v58 = vsel %vm54, %v57, 0.0
  %59 = vrot.lane.b32.xlu0 %v34, 1
  %v60 = vpop.permute.xlu0 %59
  %v61 = vsel %vm31, 1, 0
  %v62 = vlaneseq
  %v63 = vshrl.u32 %v62, 7
  %v64 = vsub.s32 0, %v63
  %v65 = vrot.slane %v61, %v64
  %vm66 = vcmp.eq.s32.totalorder %v65, 1
  %v67 = vsel %vm66, %v60, 0.0
  %68 = vrot.lane.b32.xlu0 %v36, 1
  %v69 = vpop.permute.xlu0 %68
  %v70 = vsel %vm66, %v69, 0.0
  %v71 = vpack.c.bf16 %v55, %v46
  %v72 = vpack.c.bf16 %v67, %v58
  %v73 = vpack.c.bf16 %v34, %v33
  %v74 = vpack.c.bf16 %v35, %v70
  %v75 = vpack.c.bf16 %v36, %v36
  %v76 = vld [vmem:[%s3] sm:$0xf]
  %vm77 = vcmask 588800
  %v79 = vsel %vm77, %v76, 0
  %vm81 = vcmask 1043456
  %v83 = vsel %vm81, %v75, 0
  %85 = vmatprep.subr.bf16.mxu0 0
  %86 = vmatpush1.bf16.msra.mxu0 %v71
  %87 = vmatprep.subr.bf16.mxu0 0
  %88 = vmatpush1.bf16.msra.mxu0 %v72
  %89 = vmatprep.subr.bf16.mxu0 0
  %90 = vmatpush1.bf16.msra.mxu0 %v73
  %91 = vmatprep.subr.bf16.mxu0 0
  %92 = vmatpush1.bf16.msra.mxu0 %v74
  %93 = vmatprep.subr.bf16.mxu0 0
  %94 = vmatpush1.bf16.msra.mxu0 %v83
  %95 = vmatprep.subr.bf16.mxu0 0
  %96 = vmatpush1.bf16.msra.mxu0 0
  %97 = vmatprep.subr.bf16.mxu0 0
  %98 = vmatpush1.bf16.msra.mxu0 0
  %99 = vmatprep.subr.bf16.mxu0 0
  %100 = vmatpush1.bf16.msra.mxu0 0
  %101 = vmatprep.subr.bf16.mxu0 0
  %102 = vmatpush1.bf16.msra.mxu0 0
  %103 = vmatprep.subr.bf16.mxu0 0
  %104 = vmatpush1.bf16.msra.mxu0 0
  %105 = vmatprep.subr.bf16.mxu0 0
  %106 = vmatpush1.bf16.msra.mxu0 0
  %107 = vmatprep.subr.bf16.mxu0 0
  %108 = vmatpush1.bf16.msra.mxu0 0
  %109 = vmatprep.subr.bf16.mxu0 0
  %110 = vmatpush1.bf16.msra.mxu0 0
  %111 = vmatprep.subr.bf16.mxu0 0
  %112 = vmatpush1.bf16.msra.mxu0 0
  %113 = vmatprep.subr.bf16.mxu0 0
  %114 = vmatpush1.bf16.msra.mxu0 0
  %115 = vmatprep.subr.bf16.mxu0 0
  %116 = vmatpush1.bf16.msra.mxu0 0
  %117 = vmatprep.mubr.bf16.mxu0 0
  %118 = vmatmul.mubr.bf16.gmra.mrb[0].mxu0 %v79
  %v119 = vpop.f32.mrb[0].mxu0
  %v120 = vadd.f32 0.0, %v119
  %v121 = vpop.f32.mrb[0].mxu0
  %v122 = vpop.f32.mrb[0].mxu0
  %v123 = vpop.f32.mrb[0].mxu0
  %124 = vdwg.mxu0
  %v125 = vld [vmem:[%s6] sm:$0xff]
  %127 = vset.pattern.permute.xlu0 0
  %128 = vperm.xlu0 %127, %v125
  %v129 = vpop.permute.xlu0 %128
  %v131 = vmul.f32 %v120, %v129
  %132 = vset.pattern.permute.xlu0 1
  %133 = vperm.xlu0 %132, %v125
  %v134 = vpop.permute.xlu0 %133
  %v136 = vadd.f32 %v131, %v134
  %vm137 = vcmp.gt.f32.partialorder %v136, 0.0
  %v138 = vmul.f32 %v136, 0.1
  %v139 = vsel %vm137, %v136, %v138
  %140 = vrot.lane.b32.xlu0 %v139, 9
  %v141 = vpop.permute.xlu0 %140
  %v142 = vsel %vm45, %v141, 0.0
  %143 = vrot.lane.b32.xlu0 %v139, 8
  %v144 = vpop.permute.xlu0 %143
  %v145 = vsel %vm54, %v144, 0.0
  %146 = vrot.lane.b32.xlu0 %v139, 7
  %v147 = vpop.permute.xlu0 %146
  %vm148 = vmand %vm29, %vm32
  %v149 = vsel %vm148, 1, 0
  %v150 = vlaneseq
  %v151 = vshrl.u32 %v150, 7
  %v152 = vsub.s32 0, %v151
  %v153 = vrot.slane %v149, %v152
  %vm154 = vcmp.eq.s32.totalorder %v153, 1
  %v155 = vsel %vm154, %v147, 0.0
  %156 = vrot.lane.b32.xlu0 %v139, 1
  %v157 = vpop.permute.xlu0 %156
  %v158 = vsel %vm66, %v157, 0.0
  %159 = vrot.lane.b32.xlu0 %v139, 127
  %v160 = vpop.permute.xlu0 %159
  %v161 = vsel %vm32, 1, 0
  %v162 = vlaneseq
  %v163 = vshrl.u32 %v162, 7
  %v164 = vsub.s32 0, %v163
  %v165 = vrot.slane %v161, %v164
  %vm166 = vcmp.eq.s32.totalorder %v165, 1
  %v167 = vsel %vm166, %v160, 0.0
  %168 = vrot.lane.b32.xlu0 %v139, 121
  %v169 = vpop.permute.xlu0 %168
  %vm170 = vmand %vm30, %vm31
  %v171 = vsel %vm170, 1, 0
  %v172 = vlaneseq
  %v173 = vshrl.u32 %v172, 7
  %v174 = vsub.s32 0, %v173
  %v175 = vrot.slane %v171, %v174
  %vm176 = vcmp.eq.s32.totalorder %v175, 1
  %v177 = vsel %vm176, %v169, 0.0
  %178 = vrot.lane.b32.xlu0 %v139, 120
  %v179 = vpop.permute.xlu0 %178
  %v180 = vsel %vm30, 1, 0
  %v181 = vlaneseq
  %v182 = vshrl.u32 %v181, 7
  %v183 = vsub.s32 0, %v182
  %v184 = vrot.slane %v180, %v183
  %vm185 = vcmp.eq.s32.totalorder %v184, 1
  %v186 = vsel %vm185, %v179, 0.0
  %187 = vrot.lane.b32.xlu0 %v139, 119
  %v188 = vpop.permute.xlu0 %187
  %vm189 = vmand %vm30, %vm32
  %v190 = vsel %vm189, 1, 0
  %v191 = vlaneseq
  %v192 = vshrl.u32 %v191, 7
  %v193 = vsub.s32 0, %v192
  %v194 = vrot.slane %v190, %v193
  %vm195 = vcmp.eq.s32.totalorder %v194, 1
  %v196 = vsel %vm195, %v188, 0.0
  %v197 = vpack.c.bf16 %v145, %v142
  %v198 = vpack.c.bf16 %v158, %v155
  %v199 = vpack.c.bf16 %v167, %v139
  %v200 = vpack.c.bf16 %v186, %v177
  %v201 = vpack.c.bf16 %v196, %v196
  %v202 = vld [vmem:[%s4] sm:$0xf]
  %203 = vset.pattern.permute.xlu0 2
  %204 = vperm.xlu0 %203, %v125
  %v205 = vpop.permute.xlu0 %204
  %v208 = vsel %vm77, %v202, 0
  %v211 = vsel %vm81, %v201, 0
  %213 = vmatprep.subr.bf16.mxu0 0
  %214 = vmatpush1.bf16.msra.mxu0 %v197
  %215 = vmatprep.subr.bf16.mxu0 0
  %216 = vmatpush1.bf16.msra.mxu0 %v198
  %217 = vmatprep.subr.bf16.mxu0 0
  %218 = vmatpush1.bf16.msra.mxu0 %v199
  %219 = vmatprep.subr.bf16.mxu0 0
  %220 = vmatpush1.bf16.msra.mxu0 %v200
  %221 = vmatprep.subr.bf16.mxu0 0
  %222 = vmatpush1.bf16.msra.mxu0 %v211
  %223 = vmatprep.subr.bf16.mxu0 0
  %224 = vmatpush1.bf16.msra.mxu0 0
  %225 = vmatprep.subr.bf16.mxu0 0
  %226 = vmatpush1.bf16.msra.mxu0 0
  %227 = vmatprep.subr.bf16.mxu0 0
  %228 = vmatpush1.bf16.msra.mxu0 0
  %229 = vmatprep.subr.bf16.mxu0 0
  %230 = vmatpush1.bf16.msra.mxu0 0
  %231 = vmatprep.subr.bf16.mxu0 0
  %232 = vmatpush1.bf16.msra.mxu0 0
  %233 = vmatprep.subr.bf16.mxu0 0
  %234 = vmatpush1.bf16.msra.mxu0 0
  %235 = vmatprep.subr.bf16.mxu0 0
  %236 = vmatpush1.bf16.msra.mxu0 0
  %237 = vmatprep.subr.bf16.mxu0 0
  %238 = vmatpush1.bf16.msra.mxu0 0
  %239 = vmatprep.subr.bf16.mxu0 0
  %240 = vmatpush1.bf16.msra.mxu0 0
  %241 = vmatprep.subr.bf16.mxu0 0
  %242 = vmatpush1.bf16.msra.mxu0 0
  %243 = vmatprep.subr.bf16.mxu0 0
  %244 = vmatpush1.bf16.msra.mxu0 0
  %245 = vmatprep.mubr.bf16.mxu0 0
  %246 = vmatmul.mubr.bf16.gmra.mrb[0].mxu0 %v208
  %v247 = vpop.f32.mrb[0].mxu0
  %v248 = vadd.f32 %v205, %v247
  %v249 = vpop.f32.mrb[0].mxu0
  %v250 = vpop.f32.mrb[0].mxu0
  %v251 = vpop.f32.mrb[0].mxu0
  %252 = vdwg.mxu0
  %v253 = vld [vmem:[%s5] sm:$0xf]
  %v254 = vld [vmem:[%s2] sm:$0xff]
  %v255 = vpack.c.bf16 %v254, %v254
  %vm256 = vcmask 64512
  %v258 = vsel %vm256, %v253, 0
  %v261 = vsel %vm81, %v255, 0
  %263 = vmatprep.subr.bf16.mxu0 0
  %264 = vmatpush1.bf16.msra.mxu0 %v261
  %265 = vmatprep.subr.bf16.mxu0 0
  %266 = vmatpush1.bf16.msra.mxu0 0
  %267 = vmatprep.subr.bf16.mxu0 0
  %268 = vmatpush1.bf16.msra.mxu0 0
  %269 = vmatprep.subr.bf16.mxu0 0
  %270 = vmatpush1.bf16.msra.mxu0 0
  %271 = vmatprep.subr.bf16.mxu0 0
  %272 = vmatpush1.bf16.msra.mxu0 0
  %273 = vmatprep.subr.bf16.mxu0 0
  %274 = vmatpush1.bf16.msra.mxu0 0
  %275 = vmatprep.subr.bf16.mxu0 0
  %276 = vmatpush1.bf16.msra.mxu0 0
  %277 = vmatprep.subr.bf16.mxu0 0
  %278 = vmatpush1.bf16.msra.mxu0 0
  %279 = vmatprep.subr.bf16.mxu0 0
  %280 = vmatpush1.bf16.msra.mxu0 0
  %281 = vmatprep.subr.bf16.mxu0 0
  %282 = vmatpush1.bf16.msra.mxu0 0
  %283 = vmatprep.subr.bf16.mxu0 0
  %284 = vmatpush1.bf16.msra.mxu0 0
  %285 = vmatprep.subr.bf16.mxu0 0
  %286 = vmatpush1.bf16.msra.mxu0 0
  %287 = vmatprep.subr.bf16.mxu0 0
  %288 = vmatpush1.bf16.msra.mxu0 0
  %289 = vmatprep.subr.bf16.mxu0 0
  %290 = vmatpush1.bf16.msra.mxu0 0
  %291 = vmatprep.subr.bf16.mxu0 0
  %292 = vmatpush1.bf16.msra.mxu0 0
  %293 = vmatprep.subr.bf16.mxu0 0
  %294 = vmatpush1.bf16.msra.mxu0 0
  %295 = vmatprep.mubr.bf16.mxu0 0
  %296 = vmatmul.mubr.bf16.gmra.mrb[0].mxu0 %v258
  %v297 = vpop.f32.mrb[0].mxu0
  %v298 = vadd.f32 0.0, %v297
  %v299 = vpop.f32.mrb[0].mxu0
  %v300 = vpop.f32.mrb[0].mxu0
  %v301 = vpop.f32.mrb[0].mxu0
  %302 = vdwg.mxu0
  %v303 = vadd.f32 %v248, %v298
  %304 = vset.pattern.permute.xlu0 3
  %305 = vperm.xlu0 %304, %v125
  %v306 = vpop.permute.xlu0 %305
  %v308 = vadd.f32 %v303, %v306
  %309 = vst [vmem:[%s7] sm:$0xff] %v308
  // Predicated region
  $region30: #{basic_block_forward.1} parent=0 // pred_check
    _
  $region31: #{basic_block_forward.1} parent=0 // pred_check_branch
    %311 = sbr.rel (0) target = $region33
  $region32: #{basic_block_forward.1} parent=0 // pred_region
    _
  $region33: #{basic_block_forward.1} parent=0 // pred_fallthru
    _
  // Predicated region
  $region34: #{basic_block_forward.1} parent=0 // pred_check
    _
  $region35: #{basic_block_forward.1} parent=0 // pred_check_branch
    %313 = sbr.rel (0) target = $region37
  $region36: #{basic_block_forward.1} parent=0 // pred_region
    _
  $region37: #{basic_block_forward.1} parent=0 // pred_fallthru
    _

</llo_original>
